<compile_context>
chip_gen: v7x
topology: tpu7x:2x2x1
jax: 0.10.0
libtpu: 0.0.40
codegen_flags: <defaults>
</compile_context>

<pallas_src>
import functools

import jax
import jax.numpy as jnp
from jax.experimental import pallas as pl
from jax.experimental.pallas import tpu as pltpu


def _round_up(a: int, b: int) -> int:
    return ((a + b - 1) // b) * b


def _ln_kernel_wide(x_ref, w_ref, *rest, eps: float, has_bias: bool):
    """One tile of rows, hidden laid out one-logical-row-per-lane-row."""
    if has_bias:
        b_ref, o_ref = rest
    else:
        (o_ref,) = rest

    x = x_ref[...].astype(jnp.float32)            # (T, hidden)
    mean = jnp.mean(x, axis=-1, keepdims=True)
    c = x - mean
    var = jnp.mean(c * c, axis=-1, keepdims=True)
    y = c * jax.lax.rsqrt(var + eps)
    y = y * w_ref[...]                            # w already f32, (1, hidden)
    if has_bias:
        y = y + b_ref[...]
    o_ref[...] = y.astype(o_ref.dtype)


def _ln_kernel_packed(x_ref, w_ref, s_ref, *rest, eps: float, has_bias: bool):
    """Lane-dense packed path (p_hidden == 128, several logical rows per
    lane-row). Per-group mean/var are computed on the otherwise-idle MXU via
    the constant block-diagonal averaging matrix S:
        mean_bcast = x @ S ;  var_bcast = (x - mean)^2 @ S
    """
    if has_bias:
        b_ref, o_ref = rest
    else:
        (o_ref,) = rest

    x = x_ref[...].astype(jnp.float32)            # (T, 128)
    s = s_ref[...]                                # (128, 128) f32, DMA'd once
    mean = jnp.dot(x, s, preferred_element_type=jnp.float32,
                   precision=jax.lax.Precision.HIGHEST)
    c = x - mean
    var = jnp.dot(c * c, s, preferred_element_type=jnp.float32,
                  precision=jax.lax.Precision.HIGHEST)
    y = c * jax.lax.rsqrt(var + eps)
    y = y * w_ref[...]                            # w already f32, (1, 128)
    if has_bias:
        y = y + b_ref[...]
    o_ref[...] = y.astype(o_ref.dtype)


def layer_norm(x, weight, bias=None, *, eps: float = 1e-5, tile_rows=None,
               target_block_bytes: int = 2 * 1024 * 1024):
    """LayerNorm over the last dim of `x` (matches torch.nn.functional.layer_norm)."""
    ndim = int(weight.shape[-1])
    assert x.shape[-1] == ndim
    orig_shape = x.shape
    orig_dtype = x.dtype

    rows = 1
    for d in orig_shape[:-1]:
        rows *= int(d)
    x2 = x.reshape(rows, ndim)
    has_bias = bias is not None

    # ---- Lane-dense packing: g = 128 // ndim logical rows per lane-row when
    # ndim divides 128. Pad a few rows if needed so the packed reshape is
    # exact (keeps stores full-width `vst` instead of masked partial stores).
    groups = 1
    if ndim < 128 and 128 % ndim == 0:
        groups = 128 // ndim
    pad = (-rows) % groups if groups > 1 else 0
    if pad:
        x2 = jnp.concatenate([x2, jnp.zeros((pad, ndim), dtype=x2.dtype)],
                             axis=0)
    p_rows = (rows + pad) // groups
    p_hidden = groups * ndim
    xp = x2.reshape(p_rows, p_hidden)

    # ---- Scale / shift (and averaging matrix): built + cast once in the
    # wrapper; constant index_maps mean they are DMA'd a single time.
    w = weight.astype(jnp.float32).reshape(1, ndim)
    if groups > 1:
        w = jnp.tile(w, (1, groups))
    args = [xp, w]
    in_specs = [
        None,                                            # x spec set below
        pl.BlockSpec((1, p_hidden), lambda i: (0, 0)),   # weight
    ]
    if groups > 1:
        lane = jnp.arange(p_hidden, dtype=jnp.int32)
        same_group = (lane[:, None] // ndim) == (lane[None, :] // ndim)
        s_mat = jnp.where(same_group, jnp.float32(1.0 / ndim), jnp.float32(0.0))
        args.append(s_mat)
        in_specs.append(pl.BlockSpec((p_hidden, p_hidden), lambda i: (0, 0)))
    if has_bias:
        b = bias.astype(jnp.float32).reshape(1, ndim)
        if groups > 1:
            b = jnp.tile(b, (1, groups))
        args.append(b)
        in_specs.append(pl.BlockSpec((1, p_hidden), lambda i: (0, 0)))

    # ---- Row-tile sizing: byte-based (~2 MiB/block) so narrow packed inputs
    # still reach the DMA sweet spot; sublane-multiple; never exceed the array
    # (at most one ragged boundary block whose OOB reads feed row-independent
    # math and whose OOB writes are dropped).
    itemsize = jnp.dtype(orig_dtype).itemsize
    sub = {4: 8, 2: 16, 1: 32}.get(itemsize, 8)
    if tile_rows is None:
        tile_rows = max(1, target_block_bytes // max(1, p_hidden * itemsize))
    tile_r = max(sub, (int(tile_rows) // sub) * sub)
    # v7x megacore: force >= 2 grid steps whenever there are enough rows so
    # the "parallel" axis can shard across both TensorCores.
    if p_rows > 2 * sub:
        tile_r = min(tile_r, _round_up(pl.cdiv(p_rows, 2), sub))
    if p_rows >= sub:
        tile_r = min(tile_r, (p_rows // sub) * sub)
    else:
        tile_r = p_rows                  # block == full row extent (legal)
    grid = (pl.cdiv(p_rows, tile_r),)

    in_specs[0] = pl.BlockSpec((tile_r, p_hidden), lambda i: (i, 0))
    out_spec = pl.BlockSpec((tile_r, p_hidden), lambda i: (i, 0))

    if groups > 1:
        kernel = functools.partial(_ln_kernel_packed, eps=float(eps),
                                   has_bias=has_bias)
    else:
        kernel = functools.partial(_ln_kernel_wide, eps=float(eps),
                                   has_bias=has_bias)

    out = pl.pallas_call(
        kernel,
        out_shape=jax.ShapeDtypeStruct((p_rows, p_hidden), orig_dtype),
        grid_spec=pltpu.PrefetchScalarGridSpec(
            num_scalar_prefetch=0,
            grid=grid,
            in_specs=in_specs,
            out_specs=out_spec,
        ),
        compiler_params=pltpu.CompilerParams(
            dimension_semantics=("parallel",),
            vmem_limit_bytes=48 * 1024 * 1024,
        ),
    )(*args)

    out = out.reshape(rows + pad, ndim)
    if pad:
        out = out[:rows]
    return out.reshape(orig_shape)


def _reference_layer_norm(x, weight, bias, eps=1e-5):
    xf = x.astype(jnp.float32)
    mean = jnp.mean(xf, axis=-1, keepdims=True)
    var = jnp.mean((xf - mean) ** 2, axis=-1, keepdims=True)
    y = (xf - mean) * jax.lax.rsqrt(var + eps)
    y = y * weight.astype(jnp.float32)
    if bias is not None:
        y = y + bias.astype(jnp.float32)
    return y.astype(x.dtype)


if __name__ == "__main__":
    key = jax.random.PRNGKey(0)
    k1, k2, k3, k4 = jax.random.split(key, 4)

    # Module shapes: LayerNorm(ndim=32, bias=True); input (batch=2, seq=8, hidden=32)
    batch, seq, hidden = 2, 8, 32
    x = jax.random.normal(k1, (batch, seq, hidden), dtype=jnp.float32)
    weight = jnp.ones((hidden,), dtype=jnp.float32)   # torch.ones(ndim)
    bias = jnp.zeros((hidden,), dtype=jnp.float32)    # torch.zeros(ndim)

    out = jax.block_until_ready(layer_norm(x, weight, bias, eps=1e-5))
    ref = _reference_layer_norm(x, weight, bias, eps=1e-5)
    assert out.shape == x.shape and out.dtype == x.dtype
    assert jnp.allclose(out, ref, atol=2e-5, rtol=1e-5), "mismatch (packed/MXU path)"

    # bias=None, wide hidden (>128, non-packable), multi-step grid with a
    # ragged last block.
    x2 = jax.random.normal(k2, (3, 12, 192), dtype=jnp.float32)
    w2 = jax.random.normal(k3, (192,), dtype=jnp.float32) * 0.1 + 1.0
    out2 = jax.block_until_ready(layer_norm(x2, w2, None, eps=1e-5, tile_rows=16))
    ref2 = _reference_layer_norm(x2, w2, None, eps=1e-5)
    assert jnp.allclose(out2, ref2, atol=1e-5, rtol=1e-5), "mismatch (wide/no-bias path)"

    # Packed path with rows not divisible by the packing group (pad-and-slice).
    x3 = jax.random.normal(k4, (3, 5, 32), dtype=jnp.float32)
    out3 = jax.block_until_ready(layer_norm(x3, weight, bias, eps=1e-5))
    ref3 = _reference_layer_norm(x3, weight, bias, eps=1e-5)
    assert jnp.allclose(out3, ref3, atol=2e-5, rtol=1e-5), "mismatch (padded packed path)"

    print("KERNEL_OK")
</pallas_src>

<mosaic_0001>
module attributes {stable_mosaic.version = 11 : i64} {
  func.func @_ln_kernel_packed(%arg0: i32, %arg1: memref<4x128xf32, #tpu.memory_space<vmem>>, %arg2: memref<1x128xf32, #tpu.memory_space<vmem>>, %arg3: memref<128x128xf32, #tpu.memory_space<vmem>>, %arg4: memref<1x128xf32, #tpu.memory_space<vmem>>, %arg5: memref<4x128xf32, #tpu.memory_space<vmem>>) attributes {dimension_semantics = [#tpu.dimension_semantics<parallel>], iteration_bounds = array<i64: 1>, scalar_prefetch = 0 : i64, scratch_operands = 0 : i64, tpu.core_type = #tpu.core_type<tc>, window_params = [{transform_indices = @transform_0, window_bounds = array<i64: 4, 128>}, {pipeline_mode = #tpu.pipeline_mode<synchronous>, transform_indices = @transform_1, window_bounds = array<i64: 1, 128>}, {pipeline_mode = #tpu.pipeline_mode<synchronous>, transform_indices = @transform_2, window_bounds = array<i64: 128, 128>}, {pipeline_mode = #tpu.pipeline_mode<synchronous>, transform_indices = @transform_3, window_bounds = array<i64: 1, 128>}, {transform_indices = @transform_4, window_bounds = array<i64: 4, 128>}]} {
    %c0 = arith.constant 0 : index
    %c0_0 = arith.constant 0 : index
    %0 = vector.load %arg1[%c0, %c0_0] : memref<4x128xf32, #tpu.memory_space<vmem>>, vector<4x128xf32>
    %c0_1 = arith.constant 0 : index
    %c0_2 = arith.constant 0 : index
    %1 = vector.load %arg3[%c0_1, %c0_2] : memref<128x128xf32, #tpu.memory_space<vmem>>, vector<128x128xf32>
    %cst = arith.constant dense<0.000000e+00> : vector<4x128xf32>
    %2 = tpu.matmul %0, %1, %cst {dimension_numbers = #tpu.dot_dimension_numbers<[1], [0], [0], [1], [0, 0, 1, 1], [], []>, precision = #tpu.contract_precision<fp32>} : vector<4x128xf32>, vector<128x128xf32>, vector<4x128xf32> -> vector<4x128xf32>
    %3 = arith.subf %0, %2 : vector<4x128xf32>
    %4 = arith.mulf %3, %3 : vector<4x128xf32>
    %cst_3 = arith.constant dense<0.000000e+00> : vector<4x128xf32>
    %5 = tpu.matmul %4, %1, %cst_3 {dimension_numbers = #tpu.dot_dimension_numbers<[1], [0], [0], [1], [0, 0, 1, 1], [], []>, precision = #tpu.contract_precision<fp32>} : vector<4x128xf32>, vector<128x128xf32>, vector<4x128xf32> -> vector<4x128xf32>
    %cst_4 = arith.constant 9.99999974E-6 : f32
    %6 = vector.broadcast %cst_4 : f32 to vector<4x128xf32>
    %7 = arith.addf %5, %6 : vector<4x128xf32>
    %8 = math.rsqrt %7 : vector<4x128xf32>
    %9 = arith.mulf %3, %8 : vector<4x128xf32>
    %c0_5 = arith.constant 0 : index
    %c0_6 = arith.constant 0 : index
    %10 = vector.load %arg2[%c0_5, %c0_6] : memref<1x128xf32, #tpu.memory_space<vmem>>, vector<1x128xf32>
    %11 = vector.broadcast %10 : vector<1x128xf32> to vector<4x128xf32>
    %12 = arith.mulf %9, %11 : vector<4x128xf32>
    %c0_7 = arith.constant 0 : index
    %c0_8 = arith.constant 0 : index
    %13 = vector.load %arg4[%c0_7, %c0_8] : memref<1x128xf32, #tpu.memory_space<vmem>>, vector<1x128xf32>
    %14 = vector.broadcast %13 : vector<1x128xf32> to vector<4x128xf32>
    %15 = arith.addf %12, %14 : vector<4x128xf32>
    %c0_9 = arith.constant 0 : index
    %c0_10 = arith.constant 0 : index
    %16 = vector.load %arg5[%c0_9, %c0_10] : memref<4x128xf32, #tpu.memory_space<vmem>>, vector<4x128xf32>
    tpu.vector_store %arg5[%c0_9, %c0_10], %15 {strides = array<i32>} : memref<4x128xf32, #tpu.memory_space<vmem>>, vector<4x128xf32>,
    return
  }
  func.func @transform_0(%arg0: i32) -> (i32, i32) {
    %c0_i32 = arith.constant 0 : i32
    %c0_i32_0 = arith.constant 0 : i32
    return %arg0, %c0_i32 : i32, i32
  }
  func.func @transform_1(%arg0: i32) -> (i32, i32) {
    %c0_i32 = arith.constant 0 : i32
    %c0_i32_0 = arith.constant 0 : i32
    %c0_i32_1 = arith.constant 0 : i32
    return %c0_i32, %c0_i32_0 : i32, i32
  }
  func.func @transform_2(%arg0: i32) -> (i32, i32) {
    %c0_i32 = arith.constant 0 : i32
    %c0_i32_0 = arith.constant 0 : i32
    %c0_i32_1 = arith.constant 0 : i32
    return %c0_i32, %c0_i32_0 : i32, i32
  }
  func.func @transform_3(%arg0: i32) -> (i32, i32) {
    %c0_i32 = arith.constant 0 : i32
    %c0_i32_0 = arith.constant 0 : i32
    %c0_i32_1 = arith.constant 0 : i32
    return %c0_i32, %c0_i32_0 : i32, i32
  }
  func.func @transform_4(%arg0: i32) -> (i32, i32) {
    %c0_i32 = arith.constant 0 : i32
    %c0_i32_0 = arith.constant 0 : i32
    return %arg0, %c0_i32 : i32, i32
  }
}

</mosaic_0001>

<llo_original>
// kernel: tpu_custom_call.1
$region0: #{tpu_custom_call.1}
  #allocation0 [shape = 'u32[]', space=smem, size = 0x4, offset = 0x4, fixed_abs, tag = 'smem constant byte address 0x4 - core index']
  #allocation1 [shape = 'u32[144,128]{1,0:T(1,128)}', space=vmem, size = 0x12000, scoped, tag = 'internal scratch']
  %s0 = inlined_call_operand.hbm [shape: f32[4,128], index: 0, kind: input, shape index: {}]
  %s1 = inlined_call_operand.vmem [shape: f32[1,128], index: 1, kind: input, shape index: {}]
  %s2 = inlined_call_operand.hbm [shape: f32[128,128], index: 2, kind: input, shape index: {}]
  %s3 = inlined_call_operand.vmem [shape: f32[1,128], index: 3, kind: input, shape index: {}]
  %s4 = inlined_call_operand.hbm [shape: f32[4,128], index: 4, kind: output, shape index: {}]
  %s5 = sld [smem:[#allocation0]]
  $region34: #{tpu_custom_call.1} parent=0
    _
  %s7 = ssub.s32 1, %s5
  %s8 = scalar_select 0, %s7, %s5
  $region1: #{tpu_custom_call.1} parent=0
    #allocation2 [shape = 'u8[2048]{0}', space=vmem, size = 0x800, scoped, tag = 'input window, operand 0, single buffered']
    #allocation3 [shape = 's32[1]{0}', space=sflag, size = 0x4, scoped, tag = 'scoped memory for tpu_custom_call.1']
    #allocation4 [shape = 's32[1]{0}', space=sflag, size = 0x4, scoped, tag = 'scoped memory for tpu_custom_call.1']
    #allocation5 [shape = 'u8[65536]{0}', space=vmem, size = 0x10000, scoped, tag = 'input window, operand 2, single buffered']
    #allocation6 [shape = 's32[1]{0}', space=sflag, size = 0x4, scoped, tag = 'scoped memory for tpu_custom_call.1']
    #allocation7 [shape = 'u8[2048]{0}', space=vmem, size = 0x800, scoped, tag = 'output window, operand 0, single buffered']
    %9 = vsyncpa [#allocation3], 0
    %10 = vsyncpa [#allocation6], 0
    %11 = vsyncpa [#allocation4], 0
    // Predicated region
    $region2: #{tpu_custom_call.1} parent=1 // pred_check
      _
    $region3: #{tpu_custom_call.1} parent=1 // pred_check_branch
      %13 = sbr.rel (0) target = $region5
    $region4: #{tpu_custom_call.1} parent=1 // pred_region
      %s15 = ssub.s32 64, 64
      %16 = vsyncadd [#allocation3], %s15
      %s18 = sshll.u32 [#allocation2], 4
      %s19 = int_to_ptr.vmem [resolvable:$true] %s18
      %21 = dma.hbm_to_vmem [thread:$0]  %s0, 64, %s19, [#allocation3]
    $region5: #{tpu_custom_call.1} parent=1 // pred_fallthru
      _
    // Predicated region
    $region6: #{tpu_custom_call.1} parent=1 // pred_check
      _
    $region7: #{tpu_custom_call.1} parent=1 // pred_check_branch
      %23 = sbr.rel (0) target = $region9
    $region8: #{tpu_custom_call.1} parent=1 // pred_region
      _
    $region9: #{tpu_custom_call.1} parent=1 // pred_fallthru
      _
    // Predicated region
    $region10: #{tpu_custom_call.1} parent=1 // pred_check
      _
    $region11: #{tpu_custom_call.1} parent=1 // pred_check_branch
      %25 = sbr.rel (0) target = $region13
    $region12: #{tpu_custom_call.1} parent=1 // pred_region
      %s27 = ssub.s32 2048, 2048
      %28 = vsyncadd [#allocation6], %s27
      %s29 = sshll.u32 [#allocation5], 4
      %s30 = int_to_ptr.vmem [resolvable:$true] %s29
      %35 = dma.hbm_to_vmem [thread:$0]  %s2, 2048, %s30, [#allocation6], 128, 128, 8
    $region13: #{tpu_custom_call.1} parent=1 // pred_fallthru
      _
    // Predicated region
    $region14: #{tpu_custom_call.1} parent=1 // pred_check
      _
    $region15: #{tpu_custom_call.1} parent=1 // pred_check_branch
      %37 = sbr.rel (0) target = $region17
    $region16: #{tpu_custom_call.1} parent=1 // pred_region
      _
    $region17: #{tpu_custom_call.1} parent=1 // pred_fallthru
      _
    // Predicated region
    $region18: #{tpu_custom_call.1} parent=1 // pred_check
      _
    $region19: #{tpu_custom_call.1} parent=1 // pred_check_branch
      %39 = sbr.rel (0) target = $region21
    $region20: #{tpu_custom_call.1} parent=1 // pred_region
      %40 = dma.done [#allocation3], 64
    $region21: #{tpu_custom_call.1} parent=1 // pred_fallthru
      _
    // Predicated region
    $region22: #{tpu_custom_call.1} parent=1 // pred_check
      _
    $region23: #{tpu_custom_call.1} parent=1 // pred_check_branch
      %42 = sbr.rel (0) target = $region25
    $region24: #{tpu_custom_call.1} parent=1 // pred_region
      %43 = dma.done [#allocation6], 2048
    $region25: #{tpu_custom_call.1} parent=1 // pred_fallthru
      _
    %v44 = vld [vmem:[#allocation2] sm:$0xf]
    %v45 = vld [vmem:[#allocation5] sm:$0xff]
    %v46 = vld [vmem:[#allocation5 + $0x8] sm:$0xff]
    %v47 = vld [vmem:[#allocation5 + $0x10] sm:$0xff]
    %v48 = vld [vmem:[#allocation5 + $0x18] sm:$0xff]
    %v49 = vld [vmem:[#allocation5 + $0x20] sm:$0xff]
    %v50 = vld [vmem:[#allocation5 + $0x28] sm:$0xff]
    %v51 = vld [vmem:[#allocation5 + $0x30] sm:$0xff]
    %v52 = vld [vmem:[#allocation5 + $0x38] sm:$0xff]
    %v53 = vld [vmem:[#allocation5 + $0x40] sm:$0xff]
    %v54 = vld [vmem:[#allocation5 + $0x48] sm:$0xff]
    %v55 = vld [vmem:[#allocation5 + $0x50] sm:$0xff]
    %v56 = vld [vmem:[#allocation5 + $0x58] sm:$0xff]
    %v57 = vld [vmem:[#allocation5 + $0x60] sm:$0xff]
    %v58 = vld [vmem:[#allocation5 + $0x68] sm:$0xff]
    %v59 = vld [vmem:[#allocation5 + $0x70] sm:$0xff]
    %v60 = vld [vmem:[#allocation5 + $0x78] sm:$0xff]
    %61 = vmatprep.subr.mxu0 0.0
    %v62 = vand.u32 %v45, 4294901760
    %63 = vmatpush1.msra.mxu0 %v62
    %64 = vmatprep.subr.mxu0 0.0
    %v65 = vand.u32 %v46, 4294901760
    %66 = vmatpush1.msra.mxu0 %v65
    %67 = vmatprep.subr.mxu0 0.0
    %v68 = vand.u32 %v47, 4294901760
    %69 = vmatpush1.msra.mxu0 %v68
    %70 = vmatprep.subr.mxu0 0.0
    %v71 = vand.u32 %v48, 4294901760
    %72 = vmatpush1.msra.mxu0 %v71
    %73 = vmatprep.subr.mxu0 0.0
    %v74 = vand.u32 %v49, 4294901760
    %75 = vmatpush1.msra.mxu0 %v74
    %76 = vmatprep.subr.mxu0 0.0
    %v77 = vand.u32 %v50, 4294901760
    %78 = vmatpush1.msra.mxu0 %v77
    %79 = vmatprep.subr.mxu0 0.0
    %v80 = vand.u32 %v51, 4294901760
    %81 = vmatpush1.msra.mxu0 %v80
    %82 = vmatprep.subr.mxu0 0.0
    %v83 = vand.u32 %v52, 4294901760
    %84 = vmatpush1.msra.mxu0 %v83
    %85 = vmatprep.subr.mxu0 0.0
    %v86 = vand.u32 %v53, 4294901760
    %87 = vmatpush1.msra.mxu0 %v86
    %88 = vmatprep.subr.mxu0 0.0
    %v89 = vand.u32 %v54, 4294901760
    %90 = vmatpush1.msra.mxu0 %v89
    %91 = vmatprep.subr.mxu0 0.0
    %v92 = vand.u32 %v55, 4294901760
    %93 = vmatpush1.msra.mxu0 %v92
    %94 = vmatprep.subr.mxu0 0.0
    %v95 = vand.u32 %v56, 4294901760
    %96 = vmatpush1.msra.mxu0 %v95
    %97 = vmatprep.subr.mxu0 0.0
    %v98 = vand.u32 %v57, 4294901760
    %99 = vmatpush1.msra.mxu0 %v98
    %100 = vmatprep.subr.mxu0 0.0
    %v101 = vand.u32 %v58, 4294901760
    %102 = vmatpush1.msra.mxu0 %v101
    %103 = vmatprep.subr.mxu0 0.0
    %v104 = vand.u32 %v59, 4294901760
    %105 = vmatpush1.msra.mxu0 %v104
    %106 = vmatprep.subr.mxu0 0.0
    %v107 = vand.u32 %v60, 4294901760
    %108 = vmatpush1.msra.mxu0 %v107
    %109 = vmatprep.subr.mxu0 0.0
    %110 = vmatpush1.msra.mxu0 0.0
    %111 = vmatprep.subr.mxu0 0.0
    %112 = vmatpush1.msra.mxu0 0.0
    %113 = vmatprep.subr.mxu0 0.0
    %114 = vmatpush1.msra.mxu0 0.0
    %115 = vmatprep.subr.mxu0 0.0
    %116 = vmatpush1.msra.mxu0 0.0
    %117 = vmatprep.subr.mxu0 0.0
    %118 = vmatpush1.msra.mxu0 0.0
    %119 = vmatprep.subr.mxu0 0.0
    %120 = vmatpush1.msra.mxu0 0.0
    %121 = vmatprep.subr.mxu0 0.0
    %122 = vmatpush1.msra.mxu0 0.0
    %123 = vmatprep.subr.mxu0 0.0
    %124 = vmatpush1.msra.mxu0 0.0
    %125 = vmatprep.subr.mxu0 0.0
    %126 = vmatpush1.msra.mxu0 0.0
    %127 = vmatprep.subr.mxu0 0.0
    %128 = vmatpush1.msra.mxu0 0.0
    %129 = vmatprep.subr.mxu0 0.0
    %130 = vmatpush1.msra.mxu0 0.0
    %131 = vmatprep.subr.mxu0 0.0
    %132 = vmatpush1.msra.mxu0 0.0
    %133 = vmatprep.subr.mxu0 0.0
    %134 = vmatpush1.msra.mxu0 0.0
    %135 = vmatprep.subr.mxu0 0.0
    %136 = vmatpush1.msra.mxu0 0.0
    %137 = vmatprep.subr.mxu0 0.0
    %138 = vmatpush1.msra.mxu0 0.0
    %139 = vmatprep.subr.mxu0 0.0
    %140 = vmatpush1.msra.mxu0 0.0
    %141 = vmatprep.mubr.f32.mxu0 0.0
    %v142 = vand.u32 %v44, 4294901760
    %v143 = vsub.f32 %v44, %v142
    %v144 = vand.u32 %v143, 4294901760
    %v145 = vsub.f32 %v143, %v144
    %v146 = vand.u32 %v145, 4294901760
    %147 = vmatmul.mubr.f32.gmra.mrb[0].mxu0 %v146
    %v148 = vpop.f32.mrb[0].mxu0
    %v149 = vadd.f32 0.0, %v148
    %v150 = vpop.f32.mrb[0].mxu0
    %151 = vdwg.mxu0
    %152 = vmatprep.subr.mxu0 0.0
    %v153 = vand.u32 %v45, 4294901760
    %v154 = vsub.f32 %v45, %v153
    %v155 = vand.u32 %v154, 4294901760
    %v156 = vsub.f32 %v154, %v155
    %v157 = vand.u32 %v156, 4294901760
    %158 = vmatpush1.msra.mxu0 %v157
    %159 = vmatprep.subr.mxu0 0.0
    %v160 = vand.u32 %v46, 4294901760
    %v161 = vsub.f32 %v46, %v160
    %v162 = vand.u32 %v161, 4294901760
    %v163 = vsub.f32 %v161, %v162
    %v164 = vand.u32 %v163, 4294901760
    %165 = vmatpush1.msra.mxu0 %v164
    %166 = vmatprep.subr.mxu0 0.0
    %v167 = vand.u32 %v47, 4294901760
    %v168 = vsub.f32 %v47, %v167
    %v169 = vand.u32 %v168, 4294901760
    %v170 = vsub.f32 %v168, %v169
    %v171 = vand.u32 %v170, 4294901760
    %172 = vmatpush1.msra.mxu0 %v171
    %173 = vmatprep.subr.mxu0 0.0
    %v174 = vand.u32 %v48, 4294901760
    %v175 = vsub.f32 %v48, %v174
    %v176 = vand.u32 %v175, 4294901760
    %v177 = vsub.f32 %v175, %v176
    %v178 = vand.u32 %v177, 4294901760
    %179 = vmatpush1.msra.mxu0 %v178
    %180 = vmatprep.subr.mxu0 0.0
    %v181 = vand.u32 %v49, 4294901760
    %v182 = vsub.f32 %v49, %v181
    %v183 = vand.u32 %v182, 4294901760
    %v184 = vsub.f32 %v182, %v183
    %v185 = vand.u32 %v184, 4294901760
    %186 = vmatpush1.msra.mxu0 %v185
    %187 = vmatprep.subr.mxu0 0.0
    %v188 = vand.u32 %v50, 4294901760
    %v189 = vsub.f32 %v50, %v188
    %v190 = vand.u32 %v189, 4294901760
    %v191 = vsub.f32 %v189, %v190
    %v192 = vand.u32 %v191, 4294901760
    %193 = vmatpush1.msra.mxu0 %v192
    %194 = vmatprep.subr.mxu0 0.0
    %v195 = vand.u32 %v51, 4294901760
    %v196 = vsub.f32 %v51, %v195
    %v197 = vand.u32 %v196, 4294901760
    %v198 = vsub.f32 %v196, %v197
    %v199 = vand.u32 %v198, 4294901760
    %200 = vmatpush1.msra.mxu0 %v199
    %201 = vmatprep.subr.mxu0 0.0
    %v202 = vand.u32 %v52, 4294901760
    %v203 = vsub.f32 %v52, %v202
    %v204 = vand.u32 %v203, 4294901760
    %v205 = vsub.f32 %v203, %v204
    %v206 = vand.u32 %v205, 4294901760
    %207 = vmatpush1.msra.mxu0 %v206
    %208 = vmatprep.subr.mxu0 0.0
    %v209 = vand.u32 %v53, 4294901760
    %v210 = vsub.f32 %v53, %v209
    %v211 = vand.u32 %v210, 4294901760
    %v212 = vsub.f32 %v210, %v211
    %v213 = vand.u32 %v212, 4294901760
    %214 = vmatpush1.msra.mxu0 %v213
    %215 = vmatprep.subr.mxu0 0.0
    %v216 = vand.u32 %v54, 4294901760
    %v217 = vsub.f32 %v54, %v216
    %v218 = vand.u32 %v217, 4294901760
    %v219 = vsub.f32 %v217, %v218
    %v220 = vand.u32 %v219, 4294901760
    %221 = vmatpush1.msra.mxu0 %v220
    %222 = vmatprep.subr.mxu0 0.0
    %v223 = vand.u32 %v55, 4294901760
    %v224 = vsub.f32 %v55, %v223
    %v225 = vand.u32 %v224, 4294901760
    %v226 = vsub.f32 %v224, %v225
    %v227 = vand.u32 %v226, 4294901760
    %228 = vmatpush1.msra.mxu0 %v227
    %229 = vmatprep.subr.mxu0 0.0
    %v230 = vand.u32 %v56, 4294901760
    %v231 = vsub.f32 %v56, %v230
    %v232 = vand.u32 %v231, 4294901760
    %v233 = vsub.f32 %v231, %v232
    %v234 = vand.u32 %v233, 4294901760
    %235 = vmatpush1.msra.mxu0 %v234
    %236 = vmatprep.subr.mxu0 0.0
    %v237 = vand.u32 %v57, 4294901760
    %v238 = vsub.f32 %v57, %v237
    %v239 = vand.u32 %v238, 4294901760
    %v240 = vsub.f32 %v238, %v239
    %v241 = vand.u32 %v240, 4294901760
    %242 = vmatpush1.msra.mxu0 %v241
    %243 = vmatprep.subr.mxu0 0.0
    %v244 = vand.u32 %v58, 4294901760
    %v245 = vsub.f32 %v58, %v244
    %v246 = vand.u32 %v245, 4294901760
    %v247 = vsub.f32 %v245, %v246
    %v248 = vand.u32 %v247, 4294901760
    %249 = vmatpush1.msra.mxu0 %v248
    %250 = vmatprep.subr.mxu0 0.0
    %v251 = vand.u32 %v59, 4294901760
    %v252 = vsub.f32 %v59, %v251
    %v253 = vand.u32 %v252, 4294901760
    %v254 = vsub.f32 %v252, %v253
    %v255 = vand.u32 %v254, 4294901760
    %256 = vmatpush1.msra.mxu0 %v255
    %257 = vmatprep.subr.mxu0 0.0
    %v258 = vand.u32 %v60, 4294901760
    %v259 = vsub.f32 %v60, %v258
    %v260 = vand.u32 %v259, 4294901760
    %v261 = vsub.f32 %v259, %v260
    %v262 = vand.u32 %v261, 4294901760
    %263 = vmatpush1.msra.mxu0 %v262
    %264 = vmatprep.subr.mxu0 0.0
    %265 = vmatpush1.msra.mxu0 0.0
    %266 = vmatprep.subr.mxu0 0.0
    %267 = vmatpush1.msra.mxu0 0.0
    %268 = vmatprep.subr.mxu0 0.0
    %269 = vmatpush1.msra.mxu0 0.0
    %270 = vmatprep.subr.mxu0 0.0
    %271 = vmatpush1.msra.mxu0 0.0
    %272 = vmatprep.subr.mxu0 0.0
    %273 = vmatpush1.msra.mxu0 0.0
    %274 = vmatprep.subr.mxu0 0.0
    %275 = vmatpush1.msra.mxu0 0.0
    %276 = vmatprep.subr.mxu0 0.0
    %277 = vmatpush1.msra.mxu0 0.0
    %278 = vmatprep.subr.mxu0 0.0
    %279 = vmatpush1.msra.mxu0 0.0
    %280 = vmatprep.subr.mxu0 0.0
    %281 = vmatpush1.msra.mxu0 0.0
    %282 = vmatprep.subr.mxu0 0.0
    %283 = vmatpush1.msra.mxu0 0.0
    %284 = vmatprep.subr.mxu0 0.0
    %285 = vmatpush1.msra.mxu0 0.0
    %286 = vmatprep.subr.mxu0 0.0
    %287 = vmatpush1.msra.mxu0 0.0
    %288 = vmatprep.subr.mxu0 0.0
    %289 = vmatpush1.msra.mxu0 0.0
    %290 = vmatprep.subr.mxu0 0.0
    %291 = vmatpush1.msra.mxu0 0.0
    %292 = vmatprep.subr.mxu0 0.0
    %293 = vmatpush1.msra.mxu0 0.0
    %294 = vmatprep.subr.mxu0 0.0
    %295 = vmatpush1.msra.mxu0 0.0
    %296 = vmatprep.mubr.f32.mxu0 0.0
    %v297 = vand.u32 %v44, 4294901760
    %298 = vmatmul.mubr.f32.gmra.mrb[0].mxu0 %v297
    %v299 = vpop.f32.mrb[0].mxu0
    %v300 = vadd.f32 %v149, %v299
    %v301 = vpop.f32.mrb[0].mxu0
    %302 = vdwg.mxu0
    %303 = vmatprep.subr.mxu0 0.0
    %v304 = vand.u32 %v45, 4294901760
    %v305 = vsub.f32 %v45, %v304
    %306 = vmatpush1.msra.mxu0 %v305
    %307 = vmatprep.subr.mxu0 0.0
    %v308 = vand.u32 %v46, 4294901760
    %v309 = vsub.f32 %v46, %v308
    %310 = vmatpush1.msra.mxu0 %v309
    %311 = vmatprep.subr.mxu0 0.0
    %v312 = vand.u32 %v47, 4294901760
    %v313 = vsub.f32 %v47, %v312
    %314 = vmatpush1.msra.mxu0 %v313
    %315 = vmatprep.subr.mxu0 0.0
    %v316 = vand.u32 %v48, 4294901760
    %v317 = vsub.f32 %v48, %v316
    %318 = vmatpush1.msra.mxu0 %v317
    %319 = vmatprep.subr.mxu0 0.0
    %v320 = vand.u32 %v49, 4294901760
    %v321 = vsub.f32 %v49, %v320
    %322 = vmatpush1.msra.mxu0 %v321
    %323 = vmatprep.subr.mxu0 0.0
    %v324 = vand.u32 %v50, 4294901760
    %v325 = vsub.f32 %v50, %v324
    %326 = vmatpush1.msra.mxu0 %v325
    %327 = vmatprep.subr.mxu0 0.0
    %v328 = vand.u32 %v51, 4294901760
    %v329 = vsub.f32 %v51, %v328
    %330 = vmatpush1.msra.mxu0 %v329
    %331 = vmatprep.subr.mxu0 0.0
    %v332 = vand.u32 %v52, 4294901760
    %v333 = vsub.f32 %v52, %v332
    %334 = vmatpush1.msra.mxu0 %v333
    %335 = vmatprep.subr.mxu0 0.0
    %v336 = vand.u32 %v53, 4294901760
    %v337 = vsub.f32 %v53, %v336
    %338 = vmatpush1.msra.mxu0 %v337
    %339 = vmatprep.subr.mxu0 0.0
    %v340 = vand.u32 %v54, 4294901760
    %v341 = vsub.f32 %v54, %v340
    %342 = vmatpush1.msra.mxu0 %v341
    %343 = vmatprep.subr.mxu0 0.0
    %v344 = vand.u32 %v55, 4294901760
    %v345 = vsub.f32 %v55, %v344
    %346 = vmatpush1.msra.mxu0 %v345
    %347 = vmatprep.subr.mxu0 0.0
    %v348 = vand.u32 %v56, 4294901760
    %v349 = vsub.f32 %v56, %v348
    %350 = vmatpush1.msra.mxu0 %v349
    %351 = vmatprep.subr.mxu0 0.0
    %v352 = vand.u32 %v57, 4294901760
    %v353 = vsub.f32 %v57, %v352
    %354 = vmatpush1.msra.mxu0 %v353
    %355 = vmatprep.subr.mxu0 0.0
    %v356 = vand.u32 %v58, 4294901760
    %v357 = vsub.f32 %v58, %v356
    %358 = vmatpush1.msra.mxu0 %v357
    %359 = vmatprep.subr.mxu0 0.0
    %v360 = vand.u32 %v59, 4294901760
    %v361 = vsub.f32 %v59, %v360
    %362 = vmatpush1.msra.mxu0 %v361
    %363 = vmatprep.subr.mxu0 0.0
    %v364 = vand.u32 %v60, 4294901760
    %v365 = vsub.f32 %v60, %v364
    %366 = vmatpush1.msra.mxu0 %v365
    %367 = vmatprep.subr.mxu0 0.0
    %368 = vmatpush1.msra.mxu0 0.0
    %369 = vmatprep.subr.mxu0 0.0
    %370 = vmatpush1.msra.mxu0 0.0
    %371 = vmatprep.subr.mxu0 0.0
    %372 = vmatpush1.msra.mxu0 0.0
    %373 = vmatprep.subr.mxu0 0.0
    %374 = vmatpush1.msra.mxu0 0.0
    %375 = vmatprep.subr.mxu0 0.0
    %376 = vmatpush1.msra.mxu0 0.0
    %377 = vmatprep.subr.mxu0 0.0
    %378 = vmatpush1.msra.mxu0 0.0
    %379 = vmatprep.subr.mxu0 0.0
    %380 = vmatpush1.msra.mxu0 0.0
    %381 = vmatprep.subr.mxu0 0.0
    %382 = vmatpush1.msra.mxu0 0.0
    %383 = vmatprep.subr.mxu0 0.0
    %384 = vmatpush1.msra.mxu0 0.0
    %385 = vmatprep.subr.mxu0 0.0
    %386 = vmatpush1.msra.mxu0 0.0
    %387 = vmatprep.subr.mxu0 0.0
    %388 = vmatpush1.msra.mxu0 0.0
    %389 = vmatprep.subr.mxu0 0.0
    %390 = vmatpush1.msra.mxu0 0.0
    %391 = vmatprep.subr.mxu0 0.0
    %392 = vmatpush1.msra.mxu0 0.0
    %393 = vmatprep.subr.mxu0 0.0
    %394 = vmatpush1.msra.mxu0 0.0
    %395 = vmatprep.subr.mxu0 0.0
    %396 = vmatpush1.msra.mxu0 0.0
    %397 = vmatprep.subr.mxu0 0.0
    %398 = vmatpush1.msra.mxu0 0.0
    %399 = vmatprep.mubr.f32.mxu0 0.0
    %v400 = vand.u32 %v44, 4294901760
    %v401 = vsub.f32 %v44, %v400
    %402 = vmatmul.mubr.f32.gmra.mrb[0].mxu0 %v401
    %v403 = vpop.f32.mrb[0].mxu0
    %v404 = vadd.f32 %v300, %v403
    %v405 = vpop.f32.mrb[0].mxu0
    %406 = vdwg.mxu0
    %407 = vmatprep.subr.mxu0 0.0
    %v408 = vand.u32 %v45, 4294901760
    %409 = vmatpush1.msra.mxu0 %v408
    %410 = vmatprep.subr.mxu0 0.0
    %v411 = vand.u32 %v46, 4294901760
    %412 = vmatpush1.msra.mxu0 %v411
    %413 = vmatprep.subr.mxu0 0.0
    %v414 = vand.u32 %v47, 4294901760
    %415 = vmatpush1.msra.mxu0 %v414
    %416 = vmatprep.subr.mxu0 0.0
    %v417 = vand.u32 %v48, 4294901760
    %418 = vmatpush1.msra.mxu0 %v417
    %419 = vmatprep.subr.mxu0 0.0
    %v420 = vand.u32 %v49, 4294901760
    %421 = vmatpush1.msra.mxu0 %v420
    %422 = vmatprep.subr.mxu0 0.0
    %v423 = vand.u32 %v50, 4294901760
    %424 = vmatpush1.msra.mxu0 %v423
    %425 = vmatprep.subr.mxu0 0.0
    %v426 = vand.u32 %v51, 4294901760
    %427 = vmatpush1.msra.mxu0 %v426
    %428 = vmatprep.subr.mxu0 0.0
    %v429 = vand.u32 %v52, 4294901760
    %430 = vmatpush1.msra.mxu0 %v429
    %431 = vmatprep.subr.mxu0 0.0
    %v432 = vand.u32 %v53, 4294901760
    %433 = vmatpush1.msra.mxu0 %v432
    %434 = vmatprep.subr.mxu0 0.0
    %v435 = vand.u32 %v54, 4294901760
    %436 = vmatpush1.msra.mxu0 %v435
    %437 = vmatprep.subr.mxu0 0.0
    %v438 = vand.u32 %v55, 4294901760
    %439 = vmatpush1.msra.mxu0 %v438
    %440 = vmatprep.subr.mxu0 0.0
    %v441 = vand.u32 %v56, 4294901760
    %442 = vmatpush1.msra.mxu0 %v441
    %443 = vmatprep.subr.mxu0 0.0
    %v444 = vand.u32 %v57, 4294901760
    %445 = vmatpush1.msra.mxu0 %v444
    %446 = vmatprep.subr.mxu0 0.0
    %v447 = vand.u32 %v58, 4294901760
    %448 = vmatpush1.msra.mxu0 %v447
    %449 = vmatprep.subr.mxu0 0.0
    %v450 = vand.u32 %v59, 4294901760
    %451 = vmatpush1.msra.mxu0 %v450
    %452 = vmatprep.subr.mxu0 0.0
    %v453 = vand.u32 %v60, 4294901760
    %454 = vmatpush1.msra.mxu0 %v453
    %455 = vmatprep.subr.mxu0 0.0
    %456 = vmatpush1.msra.mxu0 0.0
    %457 = vmatprep.subr.mxu0 0.0
    %458 = vmatpush1.msra.mxu0 0.0
    %459 = vmatprep.subr.mxu0 0.0
    %460 = vmatpush1.msra.mxu0 0.0
    %461 = vmatprep.subr.mxu0 0.0
    %462 = vmatpush1.msra.mxu0 0.0
    %463 = vmatprep.subr.mxu0 0.0
    %464 = vmatpush1.msra.mxu0 0.0
    %465 = vmatprep.subr.mxu0 0.0
    %466 = vmatpush1.msra.mxu0 0.0
    %467 = vmatprep.subr.mxu0 0.0
    %468 = vmatpush1.msra.mxu0 0.0
    %469 = vmatprep.subr.mxu0 0.0
    %470 = vmatpush1.msra.mxu0 0.0
    %471 = vmatprep.subr.mxu0 0.0
    %472 = vmatpush1.msra.mxu0 0.0
    %473 = vmatprep.subr.mxu0 0.0
    %474 = vmatpush1.msra.mxu0 0.0
    %475 = vmatprep.subr.mxu0 0.0
    %476 = vmatpush1.msra.mxu0 0.0
    %477 = vmatprep.subr.mxu0 0.0
    %478 = vmatpush1.msra.mxu0 0.0
    %479 = vmatprep.subr.mxu0 0.0
    %480 = vmatpush1.msra.mxu0 0.0
    %481 = vmatprep.subr.mxu0 0.0
    %482 = vmatpush1.msra.mxu0 0.0
    %483 = vmatprep.subr.mxu0 0.0
    %484 = vmatpush1.msra.mxu0 0.0
    %485 = vmatprep.subr.mxu0 0.0
    %486 = vmatpush1.msra.mxu0 0.0
    %487 = vmatprep.mubr.f32.mxu0 0.0
    %v488 = vand.u32 %v44, 4294901760
    %v489 = vsub.f32 %v44, %v488
    %v490 = vand.u32 %v489, 4294901760
    %491 = vmatmul.mubr.f32.gmra.mrb[0].mxu0 %v490
    %v492 = vpop.f32.mrb[0].mxu0
    %v493 = vadd.f32 %v404, %v492
    %v494 = vpop.f32.mrb[0].mxu0
    %495 = vdwg.mxu0
    %496 = vmatprep.subr.mxu0 0.0
    %v497 = vand.u32 %v45, 4294901760
    %v498 = vsub.f32 %v45, %v497
    %v499 = vand.u32 %v498, 4294901760
    %500 = vmatpush1.msra.mxu0 %v499
    %501 = vmatprep.subr.mxu0 0.0
    %v502 = vand.u32 %v46, 4294901760
    %v503 = vsub.f32 %v46, %v502
    %v504 = vand.u32 %v503, 4294901760
    %505 = vmatpush1.msra.mxu0 %v504
    %506 = vmatprep.subr.mxu0 0.0
    %v507 = vand.u32 %v47, 4294901760
    %v508 = vsub.f32 %v47, %v507
    %v509 = vand.u32 %v508, 4294901760
    %510 = vmatpush1.msra.mxu0 %v509
    %511 = vmatprep.subr.mxu0 0.0
    %v512 = vand.u32 %v48, 4294901760
    %v513 = vsub.f32 %v48, %v512
    %v514 = vand.u32 %v513, 4294901760
    %515 = vmatpush1.msra.mxu0 %v514
    %516 = vmatprep.subr.mxu0 0.0
    %v517 = vand.u32 %v49, 4294901760
    %v518 = vsub.f32 %v49, %v517
    %v519 = vand.u32 %v518, 4294901760
    %520 = vmatpush1.msra.mxu0 %v519
    %521 = vmatprep.subr.mxu0 0.0
    %v522 = vand.u32 %v50, 4294901760
    %v523 = vsub.f32 %v50, %v522
    %v524 = vand.u32 %v523, 4294901760
    %525 = vmatpush1.msra.mxu0 %v524
    %526 = vmatprep.subr.mxu0 0.0
    %v527 = vand.u32 %v51, 4294901760
    %v528 = vsub.f32 %v51, %v527
    %v529 = vand.u32 %v528, 4294901760
    %530 = vmatpush1.msra.mxu0 %v529
    %531 = vmatprep.subr.mxu0 0.0
    %v532 = vand.u32 %v52, 4294901760
    %v533 = vsub.f32 %v52, %v532
    %v534 = vand.u32 %v533, 4294901760
    %535 = vmatpush1.msra.mxu0 %v534
    %536 = vmatprep.subr.mxu0 0.0
    %v537 = vand.u32 %v53, 4294901760
    %v538 = vsub.f32 %v53, %v537
    %v539 = vand.u32 %v538, 4294901760
    %540 = vmatpush1.msra.mxu0 %v539
    %541 = vmatprep.subr.mxu0 0.0
    %v542 = vand.u32 %v54, 4294901760
    %v543 = vsub.f32 %v54, %v542
    %v544 = vand.u32 %v543, 4294901760
    %545 = vmatpush1.msra.mxu0 %v544
    %546 = vmatprep.subr.mxu0 0.0
    %v547 = vand.u32 %v55, 4294901760
    %v548 = vsub.f32 %v55, %v547
    %v549 = vand.u32 %v548, 4294901760
    %550 = vmatpush1.msra.mxu0 %v549
    %551 = vmatprep.subr.mxu0 0.0
    %v552 = vand.u32 %v56, 4294901760
    %v553 = vsub.f32 %v56, %v552
    %v554 = vand.u32 %v553, 4294901760
    %555 = vmatpush1.msra.mxu0 %v554
    %556 = vmatprep.subr.mxu0 0.0
    %v557 = vand.u32 %v57, 4294901760
    %v558 = vsub.f32 %v57, %v557
    %v559 = vand.u32 %v558, 4294901760
    %560 = vmatpush1.msra.mxu0 %v559
    %561 = vmatprep.subr.mxu0 0.0
    %v562 = vand.u32 %v58, 4294901760
    %v563 = vsub.f32 %v58, %v562
    %v564 = vand.u32 %v563, 4294901760
    %565 = vmatpush1.msra.mxu0 %v564
    %566 = vmatprep.subr.mxu0 0.0
    %v567 = vand.u32 %v59, 4294901760
    %v568 = vsub.f32 %v59, %v567
    %v569 = vand.u32 %v568, 4294901760
    %570 = vmatpush1.msra.mxu0 %v569
    %571 = vmatprep.subr.mxu0 0.0
    %v572 = vand.u32 %v60, 4294901760
    %v573 = vsub.f32 %v60, %v572
    %v574 = vand.u32 %v573, 4294901760
    %575 = vmatpush1.msra.mxu0 %v574
    %576 = vmatprep.subr.mxu0 0.0
    %577 = vmatpush1.msra.mxu0 0.0
    %578 = vmatprep.subr.mxu0 0.0
    %579 = vmatpush1.msra.mxu0 0.0
    %580 = vmatprep.subr.mxu0 0.0
    %581 = vmatpush1.msra.mxu0 0.0
    %582 = vmatprep.subr.mxu0 0.0
    %583 = vmatpush1.msra.mxu0 0.0
    %584 = vmatprep.subr.mxu0 0.0
    %585 = vmatpush1.msra.mxu0 0.0
    %586 = vmatprep.subr.mxu0 0.0
    %587 = vmatpush1.msra.mxu0 0.0
    %588 = vmatprep.subr.mxu0 0.0
    %589 = vmatpush1.msra.mxu0 0.0
    %590 = vmatprep.subr.mxu0 0.0
    %591 = vmatpush1.msra.mxu0 0.0
    %592 = vmatprep.subr.mxu0 0.0
    %593 = vmatpush1.msra.mxu0 0.0
    %594 = vmatprep.subr.mxu0 0.0
    %595 = vmatpush1.msra.mxu0 0.0
    %596 = vmatprep.subr.mxu0 0.0
    %597 = vmatpush1.msra.mxu0 0.0
    %598 = vmatprep.subr.mxu0 0.0
    %599 = vmatpush1.msra.mxu0 0.0
    %600 = vmatprep.subr.mxu0 0.0
    %601 = vmatpush1.msra.mxu0 0.0
    %602 = vmatprep.subr.mxu0 0.0
    %603 = vmatpush1.msra.mxu0 0.0
    %604 = vmatprep.subr.mxu0 0.0
    %605 = vmatpush1.msra.mxu0 0.0
    %606 = vmatprep.subr.mxu0 0.0
    %607 = vmatpush1.msra.mxu0 0.0
    %608 = vmatprep.mubr.f32.mxu0 0.0
    %v609 = vand.u32 %v44, 4294901760
    %610 = vmatmul.mubr.f32.gmra.mrb[0].mxu0 %v609
    %v611 = vpop.f32.mrb[0].mxu0
    %v612 = vadd.f32 %v493, %v611
    %v613 = vpop.f32.mrb[0].mxu0
    %614 = vdwg.mxu0
    %615 = vmatprep.subr.mxu0 0.0
    %v616 = vand.u32 %v45, 4294901760
    %617 = vmatpush1.msra.mxu0 %v616
    %618 = vmatprep.subr.mxu0 0.0
    %v619 = vand.u32 %v46, 4294901760
    %620 = vmatpush1.msra.mxu0 %v619
    %621 = vmatprep.subr.mxu0 0.0
    %v622 = vand.u32 %v47, 4294901760
    %623 = vmatpush1.msra.mxu0 %v622
    %624 = vmatprep.subr.mxu0 0.0
    %v625 = vand.u32 %v48, 4294901760
    %626 = vmatpush1.msra.mxu0 %v625
    %627 = vmatprep.subr.mxu0 0.0
    %v628 = vand.u32 %v49, 4294901760
    %629 = vmatpush1.msra.mxu0 %v628
    %630 = vmatprep.subr.mxu0 0.0
    %v631 = vand.u32 %v50, 4294901760
    %632 = vmatpush1.msra.mxu0 %v631
    %633 = vmatprep.subr.mxu0 0.0
    %v634 = vand.u32 %v51, 4294901760
    %635 = vmatpush1.msra.mxu0 %v634
    %636 = vmatprep.subr.mxu0 0.0
    %v637 = vand.u32 %v52, 4294901760
    %638 = vmatpush1.msra.mxu0 %v637
    %639 = vmatprep.subr.mxu0 0.0
    %v640 = vand.u32 %v53, 4294901760
    %641 = vmatpush1.msra.mxu0 %v640
    %642 = vmatprep.subr.mxu0 0.0
    %v643 = vand.u32 %v54, 4294901760
    %644 = vmatpush1.msra.mxu0 %v643
    %645 = vmatprep.subr.mxu0 0.0
    %v646 = vand.u32 %v55, 4294901760
    %647 = vmatpush1.msra.mxu0 %v646
    %648 = vmatprep.subr.mxu0 0.0
    %v649 = vand.u32 %v56, 4294901760
    %650 = vmatpush1.msra.mxu0 %v649
    %651 = vmatprep.subr.mxu0 0.0
    %v652 = vand.u32 %v57, 4294901760
    %653 = vmatpush1.msra.mxu0 %v652
    %654 = vmatprep.subr.mxu0 0.0
    %v655 = vand.u32 %v58, 4294901760
    %656 = vmatpush1.msra.mxu0 %v655
    %657 = vmatprep.subr.mxu0 0.0
    %v658 = vand.u32 %v59, 4294901760
    %659 = vmatpush1.msra.mxu0 %v658
    %660 = vmatprep.subr.mxu0 0.0
    %v661 = vand.u32 %v60, 4294901760
    %662 = vmatpush1.msra.mxu0 %v661
    %663 = vmatprep.subr.mxu0 0.0
    %664 = vmatpush1.msra.mxu0 0.0
    %665 = vmatprep.subr.mxu0 0.0
    %666 = vmatpush1.msra.mxu0 0.0
    %667 = vmatprep.subr.mxu0 0.0
    %668 = vmatpush1.msra.mxu0 0.0
    %669 = vmatprep.subr.mxu0 0.0
    %670 = vmatpush1.msra.mxu0 0.0
    %671 = vmatprep.subr.mxu0 0.0
    %672 = vmatpush1.msra.mxu0 0.0
    %673 = vmatprep.subr.mxu0 0.0
    %674 = vmatpush1.msra.mxu0 0.0
    %675 = vmatprep.subr.mxu0 0.0
    %676 = vmatpush1.msra.mxu0 0.0
    %677 = vmatprep.subr.mxu0 0.0
    %678 = vmatpush1.msra.mxu0 0.0
    %679 = vmatprep.subr.mxu0 0.0
    %680 = vmatpush1.msra.mxu0 0.0
    %681 = vmatprep.subr.mxu0 0.0
    %682 = vmatpush1.msra.mxu0 0.0
    %683 = vmatprep.subr.mxu0 0.0
    %684 = vmatpush1.msra.mxu0 0.0
    %685 = vmatprep.subr.mxu0 0.0
    %686 = vmatpush1.msra.mxu0 0.0
    %687 = vmatprep.subr.mxu0 0.0
    %688 = vmatpush1.msra.mxu0 0.0
    %689 = vmatprep.subr.mxu0 0.0
    %690 = vmatpush1.msra.mxu0 0.0
    %691 = vmatprep.subr.mxu0 0.0
    %692 = vmatpush1.msra.mxu0 0.0
    %693 = vmatprep.subr.mxu0 0.0
    %694 = vmatpush1.msra.mxu0 0.0
    %695 = vmatprep.mubr.f32.mxu0 0.0
    %v696 = vand.u32 %v44, 4294901760
    %697 = vmatmul.mubr.f32.gmra.mrb[0].mxu0 %v696
    %v698 = vpop.f32.mrb[0].mxu0
    %v699 = vadd.f32 %v612, %v698
    %v700 = vpop.f32.mrb[0].mxu0
    %701 = vdwg.mxu0
    %v702 = vsub.f32 %v44, %v699
    %v703 = vmul.f32 %v702, %v702
    %704 = vmatprep.subr.mxu0 0.0
    %v705 = vand.u32 %v45, 4294901760
    %706 = vmatpush1.msra.mxu0 %v705
    %707 = vmatprep.subr.mxu0 0.0
    %v708 = vand.u32 %v46, 4294901760
    %709 = vmatpush1.msra.mxu0 %v708
    %710 = vmatprep.subr.mxu0 0.0
    %v711 = vand.u32 %v47, 4294901760
    %712 = vmatpush1.msra.mxu0 %v711
    %713 = vmatprep.subr.mxu0 0.0
    %v714 = vand.u32 %v48, 4294901760
    %715 = vmatpush1.msra.mxu0 %v714
    %716 = vmatprep.subr.mxu0 0.0
    %v717 = vand.u32 %v49, 4294901760
    %718 = vmatpush1.msra.mxu0 %v717
    %719 = vmatprep.subr.mxu0 0.0
    %v720 = vand.u32 %v50, 4294901760
    %721 = vmatpush1.msra.mxu0 %v720
    %722 = vmatprep.subr.mxu0 0.0
    %v723 = vand.u32 %v51, 4294901760
    %724 = vmatpush1.msra.mxu0 %v723
    %725 = vmatprep.subr.mxu0 0.0
    %v726 = vand.u32 %v52, 4294901760
    %727 = vmatpush1.msra.mxu0 %v726
    %728 = vmatprep.subr.mxu0 0.0
    %v729 = vand.u32 %v53, 4294901760
    %730 = vmatpush1.msra.mxu0 %v729
    %731 = vmatprep.subr.mxu0 0.0
    %v732 = vand.u32 %v54, 4294901760
    %733 = vmatpush1.msra.mxu0 %v732
    %734 = vmatprep.subr.mxu0 0.0
    %v735 = vand.u32 %v55, 4294901760
    %736 = vmatpush1.msra.mxu0 %v735
    %737 = vmatprep.subr.mxu0 0.0
    %v738 = vand.u32 %v56, 4294901760
    %739 = vmatpush1.msra.mxu0 %v738
    %740 = vmatprep.subr.mxu0 0.0
    %v741 = vand.u32 %v57, 4294901760
    %742 = vmatpush1.msra.mxu0 %v741
    %743 = vmatprep.subr.mxu0 0.0
    %v744 = vand.u32 %v58, 4294901760
    %745 = vmatpush1.msra.mxu0 %v744
    %746 = vmatprep.subr.mxu0 0.0
    %v747 = vand.u32 %v59, 4294901760
    %748 = vmatpush1.msra.mxu0 %v747
    %749 = vmatprep.subr.mxu0 0.0
    %v750 = vand.u32 %v60, 4294901760
    %751 = vmatpush1.msra.mxu0 %v750
    %752 = vmatprep.subr.mxu0 0.0
    %753 = vmatpush1.msra.mxu0 0.0
    %754 = vmatprep.subr.mxu0 0.0
    %755 = vmatpush1.msra.mxu0 0.0
    %756 = vmatprep.subr.mxu0 0.0
    %757 = vmatpush1.msra.mxu0 0.0
    %758 = vmatprep.subr.mxu0 0.0
    %759 = vmatpush1.msra.mxu0 0.0
    %760 = vmatprep.subr.mxu0 0.0
    %761 = vmatpush1.msra.mxu0 0.0
    %762 = vmatprep.subr.mxu0 0.0
    %763 = vmatpush1.msra.mxu0 0.0
    %764 = vmatprep.subr.mxu0 0.0
    %765 = vmatpush1.msra.mxu0 0.0
    %766 = vmatprep.subr.mxu0 0.0
    %767 = vmatpush1.msra.mxu0 0.0
    %768 = vmatprep.subr.mxu0 0.0
    %769 = vmatpush1.msra.mxu0 0.0
    %770 = vmatprep.subr.mxu0 0.0
    %771 = vmatpush1.msra.mxu0 0.0
    %772 = vmatprep.subr.mxu0 0.0
    %773 = vmatpush1.msra.mxu0 0.0
    %774 = vmatprep.subr.mxu0 0.0
    %775 = vmatpush1.msra.mxu0 0.0
    %776 = vmatprep.subr.mxu0 0.0
    %777 = vmatpush1.msra.mxu0 0.0
    %778 = vmatprep.subr.mxu0 0.0
    %779 = vmatpush1.msra.mxu0 0.0
    %780 = vmatprep.subr.mxu0 0.0
    %781 = vmatpush1.msra.mxu0 0.0
    %782 = vmatprep.subr.mxu0 0.0
    %783 = vmatpush1.msra.mxu0 0.0
    %784 = vmatprep.mubr.f32.mxu0 0.0
    %v785 = vand.u32 %v703, 4294901760
    %v786 = vsub.f32 %v703, %v785
    %v787 = vand.u32 %v786, 4294901760
    %v788 = vsub.f32 %v786, %v787
    %v789 = vand.u32 %v788, 4294901760
    %790 = vmatmul.mubr.f32.gmra.mrb[0].mxu0 %v789
    %v791 = vpop.f32.mrb[0].mxu0
    %v792 = vadd.f32 1e-05, %v791
    %v793 = vpop.f32.mrb[0].mxu0
    %794 = vdwg.mxu0
    %795 = vmatprep.subr.mxu0 0.0
    %v796 = vand.u32 %v45, 4294901760
    %v797 = vsub.f32 %v45, %v796
    %v798 = vand.u32 %v797, 4294901760
    %v799 = vsub.f32 %v797, %v798
    %v800 = vand.u32 %v799, 4294901760
    %801 = vmatpush1.msra.mxu0 %v800
    %802 = vmatprep.subr.mxu0 0.0
    %v803 = vand.u32 %v46, 4294901760
    %v804 = vsub.f32 %v46, %v803
    %v805 = vand.u32 %v804, 4294901760
    %v806 = vsub.f32 %v804, %v805
    %v807 = vand.u32 %v806, 4294901760
    %808 = vmatpush1.msra.mxu0 %v807
    %809 = vmatprep.subr.mxu0 0.0
    %v810 = vand.u32 %v47, 4294901760
    %v811 = vsub.f32 %v47, %v810
    %v812 = vand.u32 %v811, 4294901760
    %v813 = vsub.f32 %v811, %v812
    %v814 = vand.u32 %v813, 4294901760
    %815 = vmatpush1.msra.mxu0 %v814
    %816 = vmatprep.subr.mxu0 0.0
    %v817 = vand.u32 %v48, 4294901760
    %v818 = vsub.f32 %v48, %v817
    %v819 = vand.u32 %v818, 4294901760
    %v820 = vsub.f32 %v818, %v819
    %v821 = vand.u32 %v820, 4294901760
    %822 = vmatpush1.msra.mxu0 %v821
    %823 = vmatprep.subr.mxu0 0.0
    %v824 = vand.u32 %v49, 4294901760
    %v825 = vsub.f32 %v49, %v824
    %v826 = vand.u32 %v825, 4294901760
    %v827 = vsub.f32 %v825, %v826
    %v828 = vand.u32 %v827, 4294901760
    %829 = vmatpush1.msra.mxu0 %v828
    %830 = vmatprep.subr.mxu0 0.0
    %v831 = vand.u32 %v50, 4294901760
    %v832 = vsub.f32 %v50, %v831
    %v833 = vand.u32 %v832, 4294901760
    %v834 = vsub.f32 %v832, %v833
    %v835 = vand.u32 %v834, 4294901760
    %836 = vmatpush1.msra.mxu0 %v835
    %837 = vmatprep.subr.mxu0 0.0
    %v838 = vand.u32 %v51, 4294901760
    %v839 = vsub.f32 %v51, %v838
    %v840 = vand.u32 %v839, 4294901760
    %v841 = vsub.f32 %v839, %v840
    %v842 = vand.u32 %v841, 4294901760
    %843 = vmatpush1.msra.mxu0 %v842
    %844 = vmatprep.subr.mxu0 0.0
    %v845 = vand.u32 %v52, 4294901760
    %v846 = vsub.f32 %v52, %v845
    %v847 = vand.u32 %v846, 4294901760
    %v848 = vsub.f32 %v846, %v847
    %v849 = vand.u32 %v848, 4294901760
    %850 = vmatpush1.msra.mxu0 %v849
    %851 = vmatprep.subr.mxu0 0.0
    %v852 = vand.u32 %v53, 4294901760
    %v853 = vsub.f32 %v53, %v852
    %v854 = vand.u32 %v853, 4294901760
    %v855 = vsub.f32 %v853, %v854
    %v856 = vand.u32 %v855, 4294901760
    %857 = vmatpush1.msra.mxu0 %v856
    %858 = vmatprep.subr.mxu0 0.0
    %v859 = vand.u32 %v54, 4294901760
    %v860 = vsub.f32 %v54, %v859
    %v861 = vand.u32 %v860, 4294901760
    %v862 = vsub.f32 %v860, %v861
    %v863 = vand.u32 %v862, 4294901760
    %864 = vmatpush1.msra.mxu0 %v863
    %865 = vmatprep.subr.mxu0 0.0
    %v866 = vand.u32 %v55, 4294901760
    %v867 = vsub.f32 %v55, %v866
    %v868 = vand.u32 %v867, 4294901760
    %v869 = vsub.f32 %v867, %v868
    %v870 = vand.u32 %v869, 4294901760
    %871 = vmatpush1.msra.mxu0 %v870
    %872 = vmatprep.subr.mxu0 0.0
    %v873 = vand.u32 %v56, 4294901760
    %v874 = vsub.f32 %v56, %v873
    %v875 = vand.u32 %v874, 4294901760
    %v876 = vsub.f32 %v874, %v875
    %v877 = vand.u32 %v876, 4294901760
    %878 = vmatpush1.msra.mxu0 %v877
    %879 = vmatprep.subr.mxu0 0.0
    %v880 = vand.u32 %v57, 4294901760
    %v881 = vsub.f32 %v57, %v880
    %v882 = vand.u32 %v881, 4294901760
    %v883 = vsub.f32 %v881, %v882
    %v884 = vand.u32 %v883, 4294901760
    %885 = vmatpush1.msra.mxu0 %v884
    %886 = vmatprep.subr.mxu0 0.0
    %v887 = vand.u32 %v58, 4294901760
    %v888 = vsub.f32 %v58, %v887
    %v889 = vand.u32 %v888, 4294901760
    %v890 = vsub.f32 %v888, %v889
    %v891 = vand.u32 %v890, 4294901760
    %892 = vmatpush1.msra.mxu0 %v891
    %893 = vmatprep.subr.mxu0 0.0
    %v894 = vand.u32 %v59, 4294901760
    %v895 = vsub.f32 %v59, %v894
    %v896 = vand.u32 %v895, 4294901760
    %v897 = vsub.f32 %v895, %v896
    %v898 = vand.u32 %v897, 4294901760
    %899 = vmatpush1.msra.mxu0 %v898
    %900 = vmatprep.subr.mxu0 0.0
    %v901 = vand.u32 %v60, 4294901760
    %v902 = vsub.f32 %v60, %v901
    %v903 = vand.u32 %v902, 4294901760
    %v904 = vsub.f32 %v902, %v903
    %v905 = vand.u32 %v904, 4294901760
    %906 = vmatpush1.msra.mxu0 %v905
    %907 = vmatprep.subr.mxu0 0.0
    %908 = vmatpush1.msra.mxu0 0.0
    %909 = vmatprep.subr.mxu0 0.0
    %910 = vmatpush1.msra.mxu0 0.0
    %911 = vmatprep.subr.mxu0 0.0
    %912 = vmatpush1.msra.mxu0 0.0
    %913 = vmatprep.subr.mxu0 0.0
    %914 = vmatpush1.msra.mxu0 0.0
    %915 = vmatprep.subr.mxu0 0.0
    %916 = vmatpush1.msra.mxu0 0.0
    %917 = vmatprep.subr.mxu0 0.0
    %918 = vmatpush1.msra.mxu0 0.0
    %919 = vmatprep.subr.mxu0 0.0
    %920 = vmatpush1.msra.mxu0 0.0
    %921 = vmatprep.subr.mxu0 0.0
    %922 = vmatpush1.msra.mxu0 0.0
    %923 = vmatprep.subr.mxu0 0.0
    %924 = vmatpush1.msra.mxu0 0.0
    %925 = vmatprep.subr.mxu0 0.0
    %926 = vmatpush1.msra.mxu0 0.0
    %927 = vmatprep.subr.mxu0 0.0
    %928 = vmatpush1.msra.mxu0 0.0
    %929 = vmatprep.subr.mxu0 0.0
    %930 = vmatpush1.msra.mxu0 0.0
    %931 = vmatprep.subr.mxu0 0.0
    %932 = vmatpush1.msra.mxu0 0.0
    %933 = vmatprep.subr.mxu0 0.0
    %934 = vmatpush1.msra.mxu0 0.0
    %935 = vmatprep.subr.mxu0 0.0
    %936 = vmatpush1.msra.mxu0 0.0
    %937 = vmatprep.subr.mxu0 0.0
    %938 = vmatpush1.msra.mxu0 0.0
    %939 = vmatprep.mubr.f32.mxu0 0.0
    %v940 = vand.u32 %v703, 4294901760
    %941 = vmatmul.mubr.f32.gmra.mrb[0].mxu0 %v940
    %v942 = vpop.f32.mrb[0].mxu0
    %v943 = vadd.f32 %v792, %v942
    %v944 = vpop.f32.mrb[0].mxu0
    %945 = vdwg.mxu0
    %946 = vmatprep.subr.mxu0 0.0
    %v947 = vand.u32 %v45, 4294901760
    %v948 = vsub.f32 %v45, %v947
    %949 = vmatpush1.msra.mxu0 %v948
    %950 = vmatprep.subr.mxu0 0.0
    %v951 = vand.u32 %v46, 4294901760
    %v952 = vsub.f32 %v46, %v951
    %953 = vmatpush1.msra.mxu0 %v952
    %954 = vmatprep.subr.mxu0 0.0
    %v955 = vand.u32 %v47, 4294901760
    %v956 = vsub.f32 %v47, %v955
    %957 = vmatpush1.msra.mxu0 %v956
    %958 = vmatprep.subr.mxu0 0.0
    %v959 = vand.u32 %v48, 4294901760
    %v960 = vsub.f32 %v48, %v959
    %961 = vmatpush1.msra.mxu0 %v960
    %962 = vmatprep.subr.mxu0 0.0
    %v963 = vand.u32 %v49, 4294901760
    %v964 = vsub.f32 %v49, %v963
    %965 = vmatpush1.msra.mxu0 %v964
    %966 = vmatprep.subr.mxu0 0.0
    %v967 = vand.u32 %v50, 4294901760
    %v968 = vsub.f32 %v50, %v967
    %969 = vmatpush1.msra.mxu0 %v968
    %970 = vmatprep.subr.mxu0 0.0
    %v971 = vand.u32 %v51, 4294901760
    %v972 = vsub.f32 %v51, %v971
    %973 = vmatpush1.msra.mxu0 %v972
    %974 = vmatprep.subr.mxu0 0.0
    %v975 = vand.u32 %v52, 4294901760
    %v976 = vsub.f32 %v52, %v975
    %977 = vmatpush1.msra.mxu0 %v976
    %978 = vmatprep.subr.mxu0 0.0
    %v979 = vand.u32 %v53, 4294901760
    %v980 = vsub.f32 %v53, %v979
    %981 = vmatpush1.msra.mxu0 %v980
    %982 = vmatprep.subr.mxu0 0.0
    %v983 = vand.u32 %v54, 4294901760
    %v984 = vsub.f32 %v54, %v983
    %985 = vmatpush1.msra.mxu0 %v984
    %986 = vmatprep.subr.mxu0 0.0
    %v987 = vand.u32 %v55, 4294901760
    %v988 = vsub.f32 %v55, %v987
    %989 = vmatpush1.msra.mxu0 %v988
    %990 = vmatprep.subr.mxu0 0.0
    %v991 = vand.u32 %v56, 4294901760
    %v992 = vsub.f32 %v56, %v991
    %993 = vmatpush1.msra.mxu0 %v992
    %994 = vmatprep.subr.mxu0 0.0
    %v995 = vand.u32 %v57, 4294901760
    %v996 = vsub.f32 %v57, %v995
    %997 = vmatpush1.msra.mxu0 %v996
    %998 = vmatprep.subr.mxu0 0.0
    %v999 = vand.u32 %v58, 4294901760
    %v1000 = vsub.f32 %v58, %v999
    %1001 = vmatpush1.msra.mxu0 %v1000
    %1002 = vmatprep.subr.mxu0 0.0
    %v1003 = vand.u32 %v59, 4294901760
    %v1004 = vsub.f32 %v59, %v1003
    %1005 = vmatpush1.msra.mxu0 %v1004
    %1006 = vmatprep.subr.mxu0 0.0
    %v1007 = vand.u32 %v60, 4294901760
    %v1008 = vsub.f32 %v60, %v1007
    %1009 = vmatpush1.msra.mxu0 %v1008
    %1010 = vmatprep.subr.mxu0 0.0
    %1011 = vmatpush1.msra.mxu0 0.0
    %1012 = vmatprep.subr.mxu0 0.0
    %1013 = vmatpush1.msra.mxu0 0.0
    %1014 = vmatprep.subr.mxu0 0.0
    %1015 = vmatpush1.msra.mxu0 0.0
    %1016 = vmatprep.subr.mxu0 0.0
    %1017 = vmatpush1.msra.mxu0 0.0
    %1018 = vmatprep.subr.mxu0 0.0
    %1019 = vmatpush1.msra.mxu0 0.0
    %1020 = vmatprep.subr.mxu0 0.0
    %1021 = vmatpush1.msra.mxu0 0.0
    %1022 = vmatprep.subr.mxu0 0.0
    %1023 = vmatpush1.msra.mxu0 0.0
    %1024 = vmatprep.subr.mxu0 0.0
    %1025 = vmatpush1.msra.mxu0 0.0
    %1026 = vmatprep.subr.mxu0 0.0
    %1027 = vmatpush1.msra.mxu0 0.0
    %1028 = vmatprep.subr.mxu0 0.0
    %1029 = vmatpush1.msra.mxu0 0.0
    %1030 = vmatprep.subr.mxu0 0.0
    %1031 = vmatpush1.msra.mxu0 0.0
    %1032 = vmatprep.subr.mxu0 0.0
    %1033 = vmatpush1.msra.mxu0 0.0
    %1034 = vmatprep.subr.mxu0 0.0
    %1035 = vmatpush1.msra.mxu0 0.0
    %1036 = vmatprep.subr.mxu0 0.0
    %1037 = vmatpush1.msra.mxu0 0.0
    %1038 = vmatprep.subr.mxu0 0.0
    %1039 = vmatpush1.msra.mxu0 0.0
    %1040 = vmatprep.subr.mxu0 0.0
    %1041 = vmatpush1.msra.mxu0 0.0
    %1042 = vmatprep.mubr.f32.mxu0 0.0
    %v1043 = vand.u32 %v703, 4294901760
    %v1044 = vsub.f32 %v703, %v1043
    %1045 = vmatmul.mubr.f32.gmra.mrb[0].mxu0 %v1044
    %v1046 = vpop.f32.mrb[0].mxu0
    %v1047 = vadd.f32 %v943, %v1046
    %v1048 = vpop.f32.mrb[0].mxu0
    %1049 = vdwg.mxu0
    %1050 = vmatprep.subr.mxu0 0.0
    %v1051 = vand.u32 %v45, 4294901760
    %1052 = vmatpush1.msra.mxu0 %v1051
    %1053 = vmatprep.subr.mxu0 0.0
    %v1054 = vand.u32 %v46, 4294901760
    %1055 = vmatpush1.msra.mxu0 %v1054
    %1056 = vmatprep.subr.mxu0 0.0
    %v1057 = vand.u32 %v47, 4294901760
    %1058 = vmatpush1.msra.mxu0 %v1057
    %1059 = vmatprep.subr.mxu0 0.0
    %v1060 = vand.u32 %v48, 4294901760
    %1061 = vmatpush1.msra.mxu0 %v1060
    %1062 = vmatprep.subr.mxu0 0.0
    %v1063 = vand.u32 %v49, 4294901760
    %1064 = vmatpush1.msra.mxu0 %v1063
    %1065 = vmatprep.subr.mxu0 0.0
    %v1066 = vand.u32 %v50, 4294901760
    %1067 = vmatpush1.msra.mxu0 %v1066
    %1068 = vmatprep.subr.mxu0 0.0
    %v1069 = vand.u32 %v51, 4294901760
    %1070 = vmatpush1.msra.mxu0 %v1069
    %1071 = vmatprep.subr.mxu0 0.0
    %v1072 = vand.u32 %v52, 4294901760
    %1073 = vmatpush1.msra.mxu0 %v1072
    %1074 = vmatprep.subr.mxu0 0.0
    %v1075 = vand.u32 %v53, 4294901760
    %1076 = vmatpush1.msra.mxu0 %v1075
    %1077 = vmatprep.subr.mxu0 0.0
    %v1078 = vand.u32 %v54, 4294901760
    %1079 = vmatpush1.msra.mxu0 %v1078
    %1080 = vmatprep.subr.mxu0 0.0
    %v1081 = vand.u32 %v55, 4294901760
    %1082 = vmatpush1.msra.mxu0 %v1081
    %1083 = vmatprep.subr.mxu0 0.0
    %v1084 = vand.u32 %v56, 4294901760
    %1085 = vmatpush1.msra.mxu0 %v1084
    %1086 = vmatprep.subr.mxu0 0.0
    %v1087 = vand.u32 %v57, 4294901760
    %1088 = vmatpush1.msra.mxu0 %v1087
    %1089 = vmatprep.subr.mxu0 0.0
    %v1090 = vand.u32 %v58, 4294901760
    %1091 = vmatpush1.msra.mxu0 %v1090
    %1092 = vmatprep.subr.mxu0 0.0
    %v1093 = vand.u32 %v59, 4294901760
    %1094 = vmatpush1.msra.mxu0 %v1093
    %1095 = vmatprep.subr.mxu0 0.0
    %v1096 = vand.u32 %v60, 4294901760
    %1097 = vmatpush1.msra.mxu0 %v1096
    %1098 = vmatprep.subr.mxu0 0.0
    %1099 = vmatpush1.msra.mxu0 0.0
    %1100 = vmatprep.subr.mxu0 0.0
    %1101 = vmatpush1.msra.mxu0 0.0
    %1102 = vmatprep.subr.mxu0 0.0
    %1103 = vmatpush1.msra.mxu0 0.0
    %1104 = vmatprep.subr.mxu0 0.0
    %1105 = vmatpush1.msra.mxu0 0.0
    %1106 = vmatprep.subr.mxu0 0.0
    %1107 = vmatpush1.msra.mxu0 0.0
    %1108 = vmatprep.subr.mxu0 0.0
    %1109 = vmatpush1.msra.mxu0 0.0
    %1110 = vmatprep.subr.mxu0 0.0
    %1111 = vmatpush1.msra.mxu0 0.0
    %1112 = vmatprep.subr.mxu0 0.0
    %1113 = vmatpush1.msra.mxu0 0.0
    %1114 = vmatprep.subr.mxu0 0.0
    %1115 = vmatpush1.msra.mxu0 0.0
    %1116 = vmatprep.subr.mxu0 0.0
    %1117 = vmatpush1.msra.mxu0 0.0
    %1118 = vmatprep.subr.mxu0 0.0
    %1119 = vmatpush1.msra.mxu0 0.0
    %1120 = vmatprep.subr.mxu0 0.0
    %1121 = vmatpush1.msra.mxu0 0.0
    %1122 = vmatprep.subr.mxu0 0.0
    %1123 = vmatpush1.msra.mxu0 0.0
    %1124 = vmatprep.subr.mxu0 0.0
    %1125 = vmatpush1.msra.mxu0 0.0
    %1126 = vmatprep.subr.mxu0 0.0
    %1127 = vmatpush1.msra.mxu0 0.0
    %1128 = vmatprep.subr.mxu0 0.0
    %1129 = vmatpush1.msra.mxu0 0.0
    %1130 = vmatprep.mubr.f32.mxu0 0.0
    %v1131 = vand.u32 %v703, 4294901760
    %v1132 = vsub.f32 %v703, %v1131
    %v1133 = vand.u32 %v1132, 4294901760
    %1134 = vmatmul.mubr.f32.gmra.mrb[0].mxu0 %v1133
    %v1135 = vpop.f32.mrb[0].mxu0
    %v1136 = vadd.f32 %v1047, %v1135
    %v1137 = vpop.f32.mrb[0].mxu0
    %1138 = vdwg.mxu0
    %1139 = vmatprep.subr.mxu0 0.0
    %v1140 = vand.u32 %v45, 4294901760
    %v1141 = vsub.f32 %v45, %v1140
    %v1142 = vand.u32 %v1141, 4294901760
    %1143 = vmatpush1.msra.mxu0 %v1142
    %1144 = vmatprep.subr.mxu0 0.0
    %v1145 = vand.u32 %v46, 4294901760
    %v1146 = vsub.f32 %v46, %v1145
    %v1147 = vand.u32 %v1146, 4294901760
    %1148 = vmatpush1.msra.mxu0 %v1147
    %1149 = vmatprep.subr.mxu0 0.0
    %v1150 = vand.u32 %v47, 4294901760
    %v1151 = vsub.f32 %v47, %v1150
    %v1152 = vand.u32 %v1151, 4294901760
    %1153 = vmatpush1.msra.mxu0 %v1152
    %1154 = vmatprep.subr.mxu0 0.0
    %v1155 = vand.u32 %v48, 4294901760
    %v1156 = vsub.f32 %v48, %v1155
    %v1157 = vand.u32 %v1156, 4294901760
    %1158 = vmatpush1.msra.mxu0 %v1157
    %1159 = vmatprep.subr.mxu0 0.0
    %v1160 = vand.u32 %v49, 4294901760
    %v1161 = vsub.f32 %v49, %v1160
    %v1162 = vand.u32 %v1161, 4294901760
    %1163 = vmatpush1.msra.mxu0 %v1162
    %1164 = vmatprep.subr.mxu0 0.0
    %v1165 = vand.u32 %v50, 4294901760
    %v1166 = vsub.f32 %v50, %v1165
    %v1167 = vand.u32 %v1166, 4294901760
    %1168 = vmatpush1.msra.mxu0 %v1167
    %1169 = vmatprep.subr.mxu0 0.0
    %v1170 = vand.u32 %v51, 4294901760
    %v1171 = vsub.f32 %v51, %v1170
    %v1172 = vand.u32 %v1171, 4294901760
    %1173 = vmatpush1.msra.mxu0 %v1172
    %1174 = vmatprep.subr.mxu0 0.0
    %v1175 = vand.u32 %v52, 4294901760
    %v1176 = vsub.f32 %v52, %v1175
    %v1177 = vand.u32 %v1176, 4294901760
    %1178 = vmatpush1.msra.mxu0 %v1177
    %1179 = vmatprep.subr.mxu0 0.0
    %v1180 = vand.u32 %v53, 4294901760
    %v1181 = vsub.f32 %v53, %v1180
    %v1182 = vand.u32 %v1181, 4294901760
    %1183 = vmatpush1.msra.mxu0 %v1182
    %1184 = vmatprep.subr.mxu0 0.0
    %v1185 = vand.u32 %v54, 4294901760
    %v1186 = vsub.f32 %v54, %v1185
    %v1187 = vand.u32 %v1186, 4294901760
    %1188 = vmatpush1.msra.mxu0 %v1187
    %1189 = vmatprep.subr.mxu0 0.0
    %v1190 = vand.u32 %v55, 4294901760
    %v1191 = vsub.f32 %v55, %v1190
    %v1192 = vand.u32 %v1191, 4294901760
    %1193 = vmatpush1.msra.mxu0 %v1192
    %1194 = vmatprep.subr.mxu0 0.0
    %v1195 = vand.u32 %v56, 4294901760
    %v1196 = vsub.f32 %v56, %v1195
    %v1197 = vand.u32 %v1196, 4294901760
    %1198 = vmatpush1.msra.mxu0 %v1197
    %1199 = vmatprep.subr.mxu0 0.0
    %v1200 = vand.u32 %v57, 4294901760
    %v1201 = vsub.f32 %v57, %v1200
    %v1202 = vand.u32 %v1201, 4294901760
    %1203 = vmatpush1.msra.mxu0 %v1202
    %1204 = vmatprep.subr.mxu0 0.0
    %v1205 = vand.u32 %v58, 4294901760
    %v1206 = vsub.f32 %v58, %v1205
    %v1207 = vand.u32 %v1206, 4294901760
    %1208 = vmatpush1.msra.mxu0 %v1207
    %1209 = vmatprep.subr.mxu0 0.0
    %v1210 = vand.u32 %v59, 4294901760
    %v1211 = vsub.f32 %v59, %v1210
    %v1212 = vand.u32 %v1211, 4294901760
    %1213 = vmatpush1.msra.mxu0 %v1212
    %1214 = vmatprep.subr.mxu0 0.0
    %v1215 = vand.u32 %v60, 4294901760
    %v1216 = vsub.f32 %v60, %v1215
    %v1217 = vand.u32 %v1216, 4294901760
    %1218 = vmatpush1.msra.mxu0 %v1217
    %1219 = vmatprep.subr.mxu0 0.0
    %1220 = vmatpush1.msra.mxu0 0.0
    %1221 = vmatprep.subr.mxu0 0.0
    %1222 = vmatpush1.msra.mxu0 0.0
    %1223 = vmatprep.subr.mxu0 0.0
    %1224 = vmatpush1.msra.mxu0 0.0
    %1225 = vmatprep.subr.mxu0 0.0
    %1226 = vmatpush1.msra.mxu0 0.0
    %1227 = vmatprep.subr.mxu0 0.0
    %1228 = vmatpush1.msra.mxu0 0.0
    %1229 = vmatprep.subr.mxu0 0.0
    %1230 = vmatpush1.msra.mxu0 0.0
    %1231 = vmatprep.subr.mxu0 0.0
    %1232 = vmatpush1.msra.mxu0 0.0
    %1233 = vmatprep.subr.mxu0 0.0
    %1234 = vmatpush1.msra.mxu0 0.0
    %1235 = vmatprep.subr.mxu0 0.0
    %1236 = vmatpush1.msra.mxu0 0.0
    %1237 = vmatprep.subr.mxu0 0.0
    %1238 = vmatpush1.msra.mxu0 0.0
    %1239 = vmatprep.subr.mxu0 0.0
    %1240 = vmatpush1.msra.mxu0 0.0
    %1241 = vmatprep.subr.mxu0 0.0
    %1242 = vmatpush1.msra.mxu0 0.0
    %1243 = vmatprep.subr.mxu0 0.0
    %1244 = vmatpush1.msra.mxu0 0.0
    %1245 = vmatprep.subr.mxu0 0.0
    %1246 = vmatpush1.msra.mxu0 0.0
    %1247 = vmatprep.subr.mxu0 0.0
    %1248 = vmatpush1.msra.mxu0 0.0
    %1249 = vmatprep.subr.mxu0 0.0
    %1250 = vmatpush1.msra.mxu0 0.0
    %1251 = vmatprep.mubr.f32.mxu0 0.0
    %v1252 = vand.u32 %v703, 4294901760
    %1253 = vmatmul.mubr.f32.gmra.mrb[0].mxu0 %v1252
    %v1254 = vpop.f32.mrb[0].mxu0
    %v1255 = vadd.f32 %v1136, %v1254
    %v1256 = vpop.f32.mrb[0].mxu0
    %1257 = vdwg.mxu0
    %1258 = vmatprep.subr.mxu0 0.0
    %v1259 = vand.u32 %v45, 4294901760
    %1260 = vmatpush1.msra.mxu0 %v1259
    %1261 = vmatprep.subr.mxu0 0.0
    %v1262 = vand.u32 %v46, 4294901760
    %1263 = vmatpush1.msra.mxu0 %v1262
    %1264 = vmatprep.subr.mxu0 0.0
    %v1265 = vand.u32 %v47, 4294901760
    %1266 = vmatpush1.msra.mxu0 %v1265
    %1267 = vmatprep.subr.mxu0 0.0
    %v1268 = vand.u32 %v48, 4294901760
    %1269 = vmatpush1.msra.mxu0 %v1268
    %1270 = vmatprep.subr.mxu0 0.0
    %v1271 = vand.u32 %v49, 4294901760
    %1272 = vmatpush1.msra.mxu0 %v1271
    %1273 = vmatprep.subr.mxu0 0.0
    %v1274 = vand.u32 %v50, 4294901760
    %1275 = vmatpush1.msra.mxu0 %v1274
    %1276 = vmatprep.subr.mxu0 0.0
    %v1277 = vand.u32 %v51, 4294901760
    %1278 = vmatpush1.msra.mxu0 %v1277
    %1279 = vmatprep.subr.mxu0 0.0
    %v1280 = vand.u32 %v52, 4294901760
    %1281 = vmatpush1.msra.mxu0 %v1280
    %1282 = vmatprep.subr.mxu0 0.0
    %v1283 = vand.u32 %v53, 4294901760
    %1284 = vmatpush1.msra.mxu0 %v1283
    %1285 = vmatprep.subr.mxu0 0.0
    %v1286 = vand.u32 %v54, 4294901760
    %1287 = vmatpush1.msra.mxu0 %v1286
    %1288 = vmatprep.subr.mxu0 0.0
    %v1289 = vand.u32 %v55, 4294901760
    %1290 = vmatpush1.msra.mxu0 %v1289
    %1291 = vmatprep.subr.mxu0 0.0
    %v1292 = vand.u32 %v56, 4294901760
    %1293 = vmatpush1.msra.mxu0 %v1292
    %1294 = vmatprep.subr.mxu0 0.0
    %v1295 = vand.u32 %v57, 4294901760
    %1296 = vmatpush1.msra.mxu0 %v1295
    %1297 = vmatprep.subr.mxu0 0.0
    %v1298 = vand.u32 %v58, 4294901760
    %1299 = vmatpush1.msra.mxu0 %v1298
    %1300 = vmatprep.subr.mxu0 0.0
    %v1301 = vand.u32 %v59, 4294901760
    %1302 = vmatpush1.msra.mxu0 %v1301
    %1303 = vmatprep.subr.mxu0 0.0
    %v1304 = vand.u32 %v60, 4294901760
    %1305 = vmatpush1.msra.mxu0 %v1304
    %1306 = vmatprep.subr.mxu0 0.0
    %1307 = vmatpush1.msra.mxu0 0.0
    %1308 = vmatprep.subr.mxu0 0.0
    %1309 = vmatpush1.msra.mxu0 0.0
    %1310 = vmatprep.subr.mxu0 0.0
    %1311 = vmatpush1.msra.mxu0 0.0
    %1312 = vmatprep.subr.mxu0 0.0
    %1313 = vmatpush1.msra.mxu0 0.0
    %1314 = vmatprep.subr.mxu0 0.0
    %1315 = vmatpush1.msra.mxu0 0.0
    %1316 = vmatprep.subr.mxu0 0.0
    %1317 = vmatpush1.msra.mxu0 0.0
    %1318 = vmatprep.subr.mxu0 0.0
    %1319 = vmatpush1.msra.mxu0 0.0
    %1320 = vmatprep.subr.mxu0 0.0
    %1321 = vmatpush1.msra.mxu0 0.0
    %1322 = vmatprep.subr.mxu0 0.0
    %1323 = vmatpush1.msra.mxu0 0.0
    %1324 = vmatprep.subr.mxu0 0.0
    %1325 = vmatpush1.msra.mxu0 0.0
    %1326 = vmatprep.subr.mxu0 0.0
    %1327 = vmatpush1.msra.mxu0 0.0
    %1328 = vmatprep.subr.mxu0 0.0
    %1329 = vmatpush1.msra.mxu0 0.0
    %1330 = vmatprep.subr.mxu0 0.0
    %1331 = vmatpush1.msra.mxu0 0.0
    %1332 = vmatprep.subr.mxu0 0.0
    %1333 = vmatpush1.msra.mxu0 0.0
    %1334 = vmatprep.subr.mxu0 0.0
    %1335 = vmatpush1.msra.mxu0 0.0
    %1336 = vmatprep.subr.mxu0 0.0
    %1337 = vmatpush1.msra.mxu0 0.0
    %1338 = vmatprep.mubr.f32.mxu0 0.0
    %v1339 = vand.u32 %v703, 4294901760
    %1340 = vmatmul.mubr.f32.gmra.mrb[0].mxu0 %v1339
    %v1341 = vpop.f32.mrb[0].mxu0
    %v1342 = vadd.f32 %v1255, %v1341
    %v1343 = vpop.f32.mrb[0].mxu0
    %1344 = vdwg.mxu0
    %v1345 = vrsqrt.pop %v1342
    %v1346 = vmul.f32 %v702, %v1345
    %v1347 = vld [vmem:[%s1] sm:$0x1]
    %v1349 = vlaneseq
    %v1350 = vshrl.u32 %v1349, 7
    %v1351 = vsub.s32 0, %v1350
    %v1352 = vrot.slane %v1347, %v1351
    %v1354 = vmul.f32 %v1346, %v1352
    %v1355 = vld [vmem:[%s3] sm:$0x1]
    %v1357 = vlaneseq
    %v1358 = vshrl.u32 %v1357, 7
    %v1359 = vsub.s32 0, %v1358
    %v1360 = vrot.slane %v1355, %v1359
    %v1362 = vadd.f32 %v1354, %v1360
    %1363 = vst [vmem:[#allocation7] sm:$0xf] %v1362
    // Predicated region
    $region26: #{tpu_custom_call.1} parent=1 // pred_check
      _
    $region27: #{tpu_custom_call.1} parent=1 // pred_check_branch
      %1365 = sbr.rel (0) target = $region29
    $region28: #{tpu_custom_call.1} parent=1 // pred_region
      %s1367 = ssub.s32 64, 64
      %1368 = vsyncadd [#allocation4], %s1367
      %s1370 = sshll.u32 [#allocation7], 4
      %s1371 = int_to_ptr.vmem [resolvable:$true] %s1370
      %1373 = dma.vmem_to_hbm [thread:$0]  %s1371, 64, %s4, [#allocation4]
    $region29: #{tpu_custom_call.1} parent=1 // pred_fallthru
      _
    // Predicated region
    $region30: #{tpu_custom_call.1} parent=1 // pred_check
      _
    $region31: #{tpu_custom_call.1} parent=1 // pred_check_branch
      %1375 = sbr.rel (0) target = $region33
    $region32: #{tpu_custom_call.1} parent=1 // pred_region
      %1376 = dma.done [#allocation4], 64
    $region33: #{tpu_custom_call.1} parent=1 // pred_fallthru
      _
    %1377 = vsyncpa [#allocation3], 1
    %1378 = vsyncpa [#allocation6], 1
    %1379 = vsyncpa [#allocation4], 1

</llo_original>
